<compile_context>
chip_gen: v6e
topology: v6e:2x2x1
jax: 0.10.0
libtpu: 0.0.40
codegen_flags: <defaults>
</compile_context>

<pallas_src>
import jax
import jax.numpy as jnp
from jax.experimental import pallas as pl
from jax.experimental.pallas import tpu as pltpu


def _identity_copy_kernel(x_ref, o_ref, sem):
    # Forward semantics of the reference module: output == input.
    # Single whole-array HBM -> HBM async copy (start + wait); no VMEM
    # staging, no vld/vst loop, no tiling constraints.
    cp = pltpu.make_async_copy(x_ref, o_ref, sem)
    cp.start()
    cp.wait()


@jax.jit
def layer_norm_forward(x, weight=None, bias=None, eps=1e-5):
    """Pallas implementation of LayerNorm.forward from test/utils.py.

    The reference forward() is `return input` — weight/bias/eps are accepted
    for parity with the module's __init__ but are unused, matching PyTorch.
    """
    # TODO(synk): if upstream LayerNorm.forward is ever fixed to call
    # F.layer_norm, fuse mean/var + lax.rsqrt(var + eps) + affine here,
    # reducing over the ORIGINAL last dim (normalized_shape), with a
    # lane-dense tiled BlockSpec pipeline — not over any repacked lane axis.
    nbytes = x.size * jnp.dtype(x.dtype).itemsize
    return pl.pallas_call(
        _identity_copy_kernel,
        out_shape=jax.ShapeDtypeStruct(x.shape, x.dtype),
        # Keep both operands in HBM; the DMA engines move the bytes directly.
        in_specs=[pl.BlockSpec(memory_space=pl.ANY)],
        out_specs=pl.BlockSpec(memory_space=pl.ANY),
        scratch_shapes=[pltpu.SemaphoreType.DMA],
        cost_estimate=pl.CostEstimate(
            flops=0, transcendentals=0, bytes_accessed=2 * nbytes),
    )(x)


if __name__ == "__main__":
    key = jax.random.PRNGKey(0)
    B, S, H = 2, 8, 32
    normalized_shape = (H,)

    kx, kw, kb = jax.random.split(key, 3)
    x = jax.random.normal(kx, (B, S, H), dtype=jnp.float32)

    # Deterministic parameter init (shapes from __init__); unused by forward,
    # matching the reference module exactly.
    weight = jax.random.normal(kw, normalized_shape, dtype=jnp.float32)
    bias = jax.random.normal(kb, normalized_shape, dtype=jnp.float32)

    y = layer_norm_forward(x, weight, bias, eps=1e-5)
    y = jax.block_until_ready(y)

    assert y.shape == x.shape and y.dtype == x.dtype
    assert bool(jnp.all(y == x))  # forward() is identity in the reference module
    print("KERNEL_OK")
</pallas_src>

<mosaic_0001>
module attributes {stable_mosaic.version = 11 : i64} {
  func.func @_identity_copy_kernel(%arg0: memref<2x8x32xf32, #tpu.memory_space<any>>, %arg1: memref<2x8x32xf32, #tpu.memory_space<any>>, %arg2: memref<!tpu.dma_semaphore, #tpu.memory_space<semaphore_mem>>) attributes {dimension_semantics = [], scalar_prefetch = 0 : i64, scratch_operands = 1 : i64, tpu.core_type = #tpu.core_type<tc>} {
    tpu.enqueue_dma source(%arg0 : memref<2x8x32xf32, #tpu.memory_space<any>>) target(%arg1 : memref<2x8x32xf32, #tpu.memory_space<any>>) target_semaphore(%arg2 : memref<!tpu.dma_semaphore, #tpu.memory_space<semaphore_mem>>)
    tpu.wait_dma2 semaphore(%arg2 : memref<!tpu.dma_semaphore, #tpu.memory_space<semaphore_mem>>) src(%arg0 : memref<2x8x32xf32, #tpu.memory_space<any>>) dst(%arg1 : memref<2x8x32xf32, #tpu.memory_space<any>>)
    return
  }
}

</mosaic_0001>

<llo_original>
// kernel: layer_norm_forward.1
$region0: #{layer_norm_forward.1}
  #allocation0 [shape = 'u32[]', space=smem, size = 0x4, offset = 0x4, fixed_abs, tag = 'smem constant byte address 0x4 - core index']
  #allocation1 [shape = 'u32[144,128]{1,0:T(1,128)}', space=vmem, size = 0x12000, scoped, tag = 'internal scratch']
  #allocation2 [shape = 's32[1]{0}', space=sflag, size = 0x4, scoped, tag = 'scratch operand']
  #allocation3 [shape = 's32[]', space=sflag, size = 0x4, offset = 0, fixed_abs, tag = 'sflag constant byte address 0x0 - dummy sync flag']
  #allocation4 [shape = 'u32[0]{0}', space=smem, size = 0, offset = 0, fixed_abs, tag = 'smem constant byte address 0x0 - null']
  %s0 = inlined_call_operand.hbm [shape: f32[2,8,32], index: 0, kind: input, shape index: {}]
  %s1 = inlined_call_operand.hbm [shape: f32[2,8,32], index: 1, kind: output, shape index: {}]
  %s2 = sld [smem:[#allocation0]]
  $region2: #{layer_norm_forward.1} parent=0
    _
  %s4 = ssub.s32 1, %s2
  %s5 = scalar_select 0, %s4, %s2
  %s7 = sshll.u32 1, 14
  %s8 = sxor.u32 4294967295, %s7
  %12 = dma.general %s0, 256, %s1, [#allocation2], 131072, [#allocation4], 0, 0
  %s13 = smul.u32 2, 8
  %s14 = smul.u32 %s13, 1
  %s15 = sshll.u32 %s14, 4
  %16 = dma.done [#allocation2], %s15
  %17 = vsyncmov [#allocation2]
  %s18 = vpop.sfrf %17
  %p19 = scmp.eq.s32.totalorder %s18, 0
  %p20 = pneg %p19
  %22 = shalt.err (%p20)

</llo_original>
